<compile_context>
chip_gen: v7x
topology: tpu7x:2x2x1
jax: 0.10.0
libtpu: 0.0.40
codegen_flags: <defaults>
</compile_context>

<pallas_src>
import math

import jax
import jax.numpy as jnp
from jax.experimental import pallas as pl
from jax.experimental.pallas import tpu as pltpu


def _shared_dropout_kernel(x_ref, m_ref, o_ref):
    """Apply the seq-shared dropout mask to one (tB, tS, H') tile.

    x_ref: (tB, tS, H') input tile
    m_ref: (tB, H')     pre-scaled mask (values are exactly 0 or 1/(1-p))
    o_ref: (tB, tS, H') output tile
    """
    mask = m_ref[...]                             # (tB, H'), native dtype
    o_ref[...] = x_ref[...] * mask[:, None, :]    # broadcast over the seq axis


def _pick_tile(dim: int, preferred: int, align: int) -> int:
    """Largest divisor of `dim` that is <= `preferred` and a multiple of
    `align`; falls back to the full dim (always a legal block size)."""
    if dim <= preferred:
        return dim
    t = preferred - (preferred % align)
    while t >= align:
        if dim % t == 0:
            return t
        t -= align
    return dim


def shared_dropout(x: jax.Array, key: jax.Array, p: float = 0.5,
                   training: bool = True) -> jax.Array:
    """SharedDropout forward (batch_first=True). x: [B, S, H]."""
    if not training or p == 0.0:
        return x
    if p >= 1.0:
        # F.dropout(p=1) zeroes everything; avoid the 0 * inf = NaN path.
        return jnp.zeros_like(x)

    B, S, H = x.shape
    keep_prob = 1.0 - p
    itemsize = jnp.dtype(x.dtype).itemsize

    # Shared mask: one Bernoulli(1-p) per (batch, hidden), scaled by 1/(1-p),
    # cast to x's dtype so the in-kernel multiply stays dtype-native.
    # TODO(synk): in-kernel pltpu.prng_seed/prng_random_bits would remove this
    # tiny host-side draw; negligible vs. the HBM-bound streaming cost.
    keep = jax.random.bernoulli(key, keep_prob, (B, H))
    mask = (keep.astype(jnp.float32) * (1.0 / keep_prob)).astype(x.dtype)

    # --- Lane-densify the feature axis (pack k seq positions) ---------------
    k = 1
    if H % 128 != 0:
        k_cand = 128 // math.gcd(H, 128)      # smallest k with (k*H) % 128 == 0
        if S % k_cand == 0:
            k = k_cand
    S2, H2 = S // k, H * k
    x2 = x.reshape(B, S2, H2) if k > 1 else x
    mask2 = jnp.tile(mask, (1, k)) if k > 1 else mask

    # --- Tile sizes ----------------------------------------------------------
    # tB aligned to the dtype's sublane packing (f32:8, bf16:16, int8/fp8:32),
    # or the full (small) B, which is always a legal mask block.
    pack = max(8, 32 // itemsize)
    tB = _pick_tile(B, pack, pack)

    # tS from a ~2 MiB per-block byte budget (x-block + out-block, each double
    # buffered => ~8 MiB total), instead of a fixed tS.
    block_budget = 2 << 20
    max_ts = max(8, block_budget // max(1, tB * H2 * itemsize))
    if B // tB == 1 and S2 % 16 == 0:
        # Keep >= 2 S blocks so v7x still has a parallel axis to split across
        # its two TensorCores when the B grid dim collapses to 1.
        max_ts = min(max_ts, S2 // 2)
    tS = _pick_tile(S2, min(S2, max_ts), 8)

    # S innermost: the mask block index depends only on b, so its DMA is
    # elided across all inner-S steps.  Do not reorder this grid.
    grid = (B // tB, S2 // tS)

    block_bytes = tB * tS * H2 * itemsize
    vmem_limit = int(min(48 << 20,                       # safe on v7x (64 MiB)
                         max(16 << 20,
                             4 * block_bytes            # x + out, 2 buffers each
                             + 2 * tB * H2 * itemsize   # mask (double-buffered)
                             + (2 << 20))))             # headroom

    out2 = pl.pallas_call(
        _shared_dropout_kernel,
        out_shape=jax.ShapeDtypeStruct((B, S2, H2), x.dtype),
        grid=grid,
        in_specs=[
            pl.BlockSpec((tB, tS, H2), lambda b, s: (b, s, 0)),   # x tile
            pl.BlockSpec((tB, H2), lambda b, s: (b, 0)),          # mask (B only)
        ],
        out_specs=pl.BlockSpec((tB, tS, H2), lambda b, s: (b, s, 0)),
        compiler_params=pltpu.CompilerParams(
            dimension_semantics=("parallel", "parallel"),
            vmem_limit_bytes=vmem_limit),
    )(x2, mask2)

    return out2.reshape(B, S, H) if k > 1 else out2


# TODO(synk): batch_first=False path of the original module is not wired up
# (the module's default batch_first=True is what is implemented here).


if __name__ == "__main__":
    root = jax.random.PRNGKey(0)
    kx, kd = jax.random.split(root)

    # --- Primary case: H=32 exercises the lane-densify (k=4) path -----------
    B, S, H = 2, 8, 32
    p = 0.5
    x = jax.random.normal(kx, (B, S, H), dtype=jnp.float32)

    out = jax.block_until_ready(shared_dropout(x, kd, p=p, training=True))

    assert out.shape == x.shape and out.dtype == x.dtype
    scale = 1.0 / (1.0 - p)
    safe_x = jnp.where(x == 0, jnp.float32(1.0), x)     # avoid 0/0 in the check
    ratio = out / safe_x                                # == broadcast mask
    # Mask shared across the seq axis.
    assert bool(jnp.all(jnp.abs(ratio - ratio[:, :1, :]) < 1e-5))
    # Values are exactly 0 or x / (1 - p).
    ok_vals = jnp.logical_or(jnp.abs(ratio) < 1e-5,
                             jnp.abs(ratio - scale) < 1e-4)
    assert bool(jnp.all(ok_vals))
    # Eval mode is identity; p=1 zeroes everything (no NaN).
    assert bool(jnp.all(shared_dropout(x, kd, p=p, training=False) == x))
    assert bool(jnp.all(shared_dropout(x, kd, p=1.0, training=True) == 0))

    # --- Secondary case: H=128 (already lane-dense, k=1) with >1 S blocks ----
    B2, S2, H2 = 2, 16, 128
    kx2, kd2 = jax.random.split(kd)
    x2 = jax.random.normal(kx2, (B2, S2, H2), dtype=jnp.float32)
    out2 = jax.block_until_ready(shared_dropout(x2, kd2, p=p, training=True))
    keep_ref = jax.random.bernoulli(kd2, 1.0 - p, (B2, H2))
    mask_ref = (keep_ref.astype(jnp.float32) * scale).astype(x2.dtype)
    expected2 = x2 * mask_ref[:, None, :]
    assert bool(jnp.all(out2 == expected2))

    print("KERNEL_OK")
</pallas_src>

<mosaic_0001>
module attributes {stable_mosaic.version = 11 : i64} {
  func.func @_shared_dropout_kernel(%arg0: i32, %arg1: i32, %arg2: memref<2x2x128xf32, #tpu.memory_space<vmem>>, %arg3: memref<2x128xf32, #tpu.memory_space<vmem>>, %arg4: memref<2x2x128xf32, #tpu.memory_space<vmem>>) attributes {dimension_semantics = [#tpu.dimension_semantics<parallel>, #tpu.dimension_semantics<parallel>], iteration_bounds = array<i64: 1, 1>, scalar_prefetch = 0 : i64, scratch_operands = 0 : i64, tpu.core_type = #tpu.core_type<tc>, window_params = [{transform_indices = @transform_0, window_bounds = array<i64: 2, 2, 128>}, {transform_indices = @transform_1, window_bounds = array<i64: 2, 128>}, {transform_indices = @transform_2, window_bounds = array<i64: 2, 2, 128>}]} {
    %c0 = arith.constant 0 : index
    %c0_0 = arith.constant 0 : index
    %0 = vector.load %arg3[%c0, %c0_0] : memref<2x128xf32, #tpu.memory_space<vmem>>, vector<2x128xf32>
    %c0_1 = arith.constant 0 : index
    %c0_2 = arith.constant 0 : index
    %c0_3 = arith.constant 0 : index
    %1 = vector.load %arg2[%c0_1, %c0_2, %c0_3] : memref<2x2x128xf32, #tpu.memory_space<vmem>>, vector<2x2x128xf32>
    %2 = vector.shape_cast %0 : vector<2x128xf32> to vector<2x1x128xf32>
    %3 = vector.broadcast %2 : vector<2x1x128xf32> to vector<2x2x128xf32>
    %4 = arith.mulf %1, %3 : vector<2x2x128xf32>
    %c0_4 = arith.constant 0 : index
    %c0_5 = arith.constant 0 : index
    %c0_6 = arith.constant 0 : index
    %5 = vector.load %arg4[%c0_4, %c0_5, %c0_6] : memref<2x2x128xf32, #tpu.memory_space<vmem>>, vector<2x2x128xf32>
    tpu.vector_store %arg4[%c0_4, %c0_5, %c0_6], %4 {strides = array<i32>} : memref<2x2x128xf32, #tpu.memory_space<vmem>>, vector<2x2x128xf32>,
    return
  }
  func.func @transform_0(%arg0: i32, %arg1: i32) -> (i32, i32, i32) {
    %c0_i32 = arith.constant 0 : i32
    %c0_i32_0 = arith.constant 0 : i32
    return %arg0, %arg1, %c0_i32 : i32, i32, i32
  }
  func.func @transform_1(%arg0: i32, %arg1: i32) -> (i32, i32) {
    %c0_i32 = arith.constant 0 : i32
    %c0_i32_0 = arith.constant 0 : i32
    return %arg0, %c0_i32 : i32, i32
  }
  func.func @transform_2(%arg0: i32, %arg1: i32) -> (i32, i32, i32) {
    %c0_i32 = arith.constant 0 : i32
    %c0_i32_0 = arith.constant 0 : i32
    return %arg0, %arg1, %c0_i32 : i32, i32, i32
  }
}

</mosaic_0001>

<llo_original>
// kernel: tpu_custom_call.1
$region0: #{tpu_custom_call.1}
  #allocation0 [shape = 'u32[]', space=smem, size = 0x4, offset = 0x4, fixed_abs, tag = 'smem constant byte address 0x4 - core index']
  #allocation1 [shape = 'u32[144,128]{1,0:T(1,128)}', space=vmem, size = 0x12000, scoped, tag = 'internal scratch']
  %s0 = inlined_call_operand.hbm [shape: f32[2,2,128], index: 0, kind: input, shape index: {}]
  %s1 = inlined_call_operand.vmem [shape: f32[2,128], index: 1, kind: input, shape index: {}]
  %s2 = inlined_call_operand.hbm [shape: f32[2,2,128], index: 2, kind: output, shape index: {}]
  %s3 = sld [smem:[#allocation0]]
  $region22: #{tpu_custom_call.1} parent=0
    _
  %s5 = ssub.s32 1, %s3
  %s6 = scalar_select 0, %s5, %s3
  $region1: #{tpu_custom_call.1} parent=0
    #allocation2 [shape = 'u8[2048]{0}', space=vmem, size = 0x800, scoped, tag = 'input window, operand 0, single buffered']
    #allocation3 [shape = 's32[1]{0}', space=sflag, size = 0x4, scoped, tag = 'scoped memory for tpu_custom_call.1']
    #allocation4 [shape = 's32[1]{0}', space=sflag, size = 0x4, scoped, tag = 'scoped memory for tpu_custom_call.1']
    #allocation5 [shape = 'u8[2048]{0}', space=vmem, size = 0x800, scoped, tag = 'output window, operand 0, single buffered']
    %7 = vsyncpa [#allocation3], 0
    %8 = vsyncpa [#allocation4], 0
    // Predicated region
    $region2: #{tpu_custom_call.1} parent=1 // pred_check
      _
    $region3: #{tpu_custom_call.1} parent=1 // pred_check_branch
      %10 = sbr.rel (0) target = $region5
    $region4: #{tpu_custom_call.1} parent=1 // pred_region
      %s12 = ssub.s32 64, 64
      %13 = vsyncadd [#allocation3], %s12
      %s14 = sshll.u32 [#allocation2], 4
      %s15 = int_to_ptr.vmem [resolvable:$true] %s14
      %20 = dma.hbm_to_vmem [thread:$0]  %s0, 64, %s15, [#allocation3], 32, 32, 2
    $region5: #{tpu_custom_call.1} parent=1 // pred_fallthru
      _
    // Predicated region
    $region6: #{tpu_custom_call.1} parent=1 // pred_check
      _
    $region7: #{tpu_custom_call.1} parent=1 // pred_check_branch
      %22 = sbr.rel (0) target = $region9
    $region8: #{tpu_custom_call.1} parent=1 // pred_region
      _
    $region9: #{tpu_custom_call.1} parent=1 // pred_fallthru
      _
    // Predicated region
    $region10: #{tpu_custom_call.1} parent=1 // pred_check
      _
    $region11: #{tpu_custom_call.1} parent=1 // pred_check_branch
      %24 = sbr.rel (0) target = $region13
    $region12: #{tpu_custom_call.1} parent=1 // pred_region
      %25 = dma.done [#allocation3], 64
    $region13: #{tpu_custom_call.1} parent=1 // pred_fallthru
      _
    %v26 = vld [vmem:[%s1] sm:$0x3]
    %v27 = vld [vmem:[#allocation2] sm:$0x3]
    %v28 = vld [vmem:[#allocation2 + $0x2] sm:$0x3]
    %v31 = vunpack.c.l.s4 1966171168
    %v32 = vunpack.c.0.s8 %v31
    %v33 = vlaneseq
    %v34 = vshrl.u32 %v33, 7
    %v35 = vsub.s32 %v32, %v34
    %v36 = vrot.slane %v26, %v35
    %v37 = vcombine.high %v36, %v36
    %v39 = vunpack.c.l.s4 1966171168
    %v40 = vunpack.c.0.s8 %v39
    %v41 = vlaneseq
    %v42 = vshrl.u32 %v41, 7
    %v43 = vsub.s32 %v40, %v42
    %v44 = vrot.slane %v36, %v43
    %v46 = vunpack.c.l.s4 1966171168
    %v47 = vunpack.c.0.s8 %v46
    %v48 = vlaneseq
    %v49 = vshrl.u32 %v48, 7
    %v50 = vsub.s32 %v47, %v49
    %v51 = vrot.slane %v37, %v50
    %v52 = vlaneseq
    %v53 = vshrl.u32 %v52, 7
    %v54 = vsub.s32 0, %v53
    %v55 = vrot.slane %v44, %v54
    %v56 = vlaneseq
    %v57 = vshrl.u32 %v56, 7
    %v58 = vsub.s32 0, %v57
    %v59 = vrot.slane %v51, %v58
    %v62 = vmul.f32 %v27, %v55
    %v63 = vmul.f32 %v28, %v59
    %64 = vst [vmem:[#allocation5] sm:$0x3] %v62
    %65 = vst [vmem:[#allocation5 + $0x2] sm:$0x3] %v63
    // Predicated region
    $region14: #{tpu_custom_call.1} parent=1 // pred_check
      _
    $region15: #{tpu_custom_call.1} parent=1 // pred_check_branch
      %67 = sbr.rel (0) target = $region17
    $region16: #{tpu_custom_call.1} parent=1 // pred_region
      %s69 = ssub.s32 64, 64
      %70 = vsyncadd [#allocation4], %s69
      %s71 = sshll.u32 [#allocation5], 4
      %s72 = int_to_ptr.vmem [resolvable:$true] %s71
      %77 = dma.vmem_to_hbm [thread:$0]  %s72, 64, %s2, [#allocation4], 32, 32, 2
    $region17: #{tpu_custom_call.1} parent=1 // pred_fallthru
      _
    // Predicated region
    $region18: #{tpu_custom_call.1} parent=1 // pred_check
      _
    $region19: #{tpu_custom_call.1} parent=1 // pred_check_branch
      %79 = sbr.rel (0) target = $region21
    $region20: #{tpu_custom_call.1} parent=1 // pred_region
      %80 = dma.done [#allocation4], 64
    $region21: #{tpu_custom_call.1} parent=1 // pred_fallthru
      _
    %81 = vsyncpa [#allocation3], 1
    %82 = vsyncpa [#allocation4], 1

</llo_original>
